<compile_context>
chip_gen: v5e
topology: v5e:2x2
jax: 0.10.0
libtpu: 0.0.40
codegen_flags: <defaults>
</compile_context>

<pallas_src>
import math
import functools

import jax
import jax.numpy as jnp
from jax.experimental import pallas as pl
from jax.experimental.pallas import tpu as pltpu

_LANE = 128


def _concat_kernel(a_ref, b_ref, o_ref, *, w0):
    # a_ref: (tl, w0), b_ref: (tl, w1), o_ref: (tl, w0 + w1) — lane-dense 2-D.
    o_ref[:, :w0] = a_ref[...]
    o_ref[:, w0:] = b_ref[...]


def _round_up(x, m):
    return ((x + m - 1) // m) * m


def _vmem_budget_and_limit():
    """(tile-selection budget, explicit scoped-VMEM limit) in bytes."""
    try:
        cap = int(pltpu.get_tpu_info().vmem_capacity_bytes)
    except Exception:
        cap = 64 * 1024 * 1024  # conservative fallback (v7x-sized VMEM)
    # ~60% of physical for the double-buffered blocks, ~75% as the scoped
    # limit -> ample headroom on v5e/v6e (128 MiB) and safe on v7x (64 MiB).
    return int(cap * 0.60), int(cap * 0.75)


def _choose_lead_tile(lead, padded_row_bytes, budget_bytes, sub_pack):
    """Largest sublane-aligned row tile whose double-buffered (in+out, padded)
    blocks fit the budget; prefers >=2 grid steps only when blocks stay big."""
    if lead <= sub_pack:
        return max(lead, 1)
    max_rows = max(int(budget_bytes // (2 * padded_row_bytes)), 1)
    tl = max((max_rows // sub_pack) * sub_pack, sub_pack)
    if tl >= lead:
        # Whole extent fits in one block. Split into two "parallel" steps
        # (second TensorCore on v7x) only if each half stays >= 8 MiB so the
        # ~0.35us per-step overhead remains negligible on v5e/v6e as well.
        half = _round_up(pl.cdiv(lead, 2), sub_pack)
        if half < lead and half * padded_row_bytes >= 8 * 1024 * 1024:
            return half
        return lead
    return tl


def token_concat(t0, t1, dim=2):
    """Equivalent of torch.cat((t0, t1), dim=dim)."""
    assert t0.ndim == t1.ndim, "rank mismatch"
    nd = t0.ndim
    dim = dim % nd
    for ax in range(nd):
        if ax != dim:
            assert t0.shape[ax] == t1.shape[ax], "shape mismatch off the concat axis"
    assert t0.dtype == t1.dtype

    lead = math.prod(t0.shape[:dim])
    n0, n1 = t0.shape[dim], t1.shape[dim]
    trail = math.prod(t0.shape[dim + 1:])
    out_shape_full = t0.shape[:dim] + (n0 + n1,) + t0.shape[dim + 1:]

    # Flatten concat axis + trailing dims into the lane axis (lane-dense I/O).
    w0, w1 = n0 * trail, n1 * trail
    a = t0.reshape(lead, w0)
    b = t1.reshape(lead, w1)

    itemsize = jnp.dtype(t0.dtype).itemsize
    sub_pack = max(8, (8 * 4) // itemsize)  # 8 f32 / 16 bf16 / 32 int8 rows
    # Layout-aware per-row VMEM bytes: lane-pad each block's width to 128.
    padded_row_bytes = (_round_up(w0, _LANE) + _round_up(w1, _LANE)
                        + _round_up(w0 + w1, _LANE)) * itemsize

    budget, vmem_limit = _vmem_budget_and_limit()
    tl = _choose_lead_tile(lead, padded_row_bytes, budget, sub_pack)
    grid = (pl.cdiv(lead, tl),)

    out = pl.pallas_call(
        functools.partial(_concat_kernel, w0=w0),
        out_shape=jax.ShapeDtypeStruct((lead, w0 + w1), t0.dtype),
        grid=grid,
        in_specs=[
            pl.BlockSpec((tl, w0), lambda i: (i, 0)),
            pl.BlockSpec((tl, w1), lambda i: (i, 0)),
        ],
        out_specs=pl.BlockSpec((tl, w0 + w1), lambda i: (i, 0)),
        compiler_params=pltpu.CompilerParams(
            dimension_semantics=("parallel",),
            vmem_limit_bytes=vmem_limit,
        ),
    )(a, b)

    return out.reshape(out_shape_full)


if __name__ == "__main__":
    root = jax.random.PRNGKey(0)
    k0, k1, k2 = jax.random.split(root, 3)

    # Token tensors: (batch=2, heads=4, tokens=8, hidden=32), concat on dim=2.
    t_0 = jax.random.normal(k0, (2, 4, 8, 32), jnp.float32)
    t_1 = jax.random.normal(k1, (2, 4, 8, 32), jnp.float32)

    out = token_concat(t_0, t_1, dim=2)
    jax.block_until_ready(out)
    ref = jnp.concatenate((t_0, t_1), axis=2)
    assert out.shape == (2, 4, 16, 32), out.shape
    assert bool(jnp.array_equal(out, ref))

    # Uneven token counts along the concat axis.
    t_2 = jax.random.normal(k2, (2, 4, 4, 32), jnp.float32)
    out2 = token_concat(t_0, t_2, dim=2)
    jax.block_until_ready(out2)
    ref2 = jnp.concatenate((t_0, t_2), axis=2)
    assert out2.shape == (2, 4, 12, 32), out2.shape
    assert bool(jnp.array_equal(out2, ref2))

    print("KERNEL_OK")
</pallas_src>

<mosaic_0001>
module attributes {stable_mosaic.version = 11 : i64} {
  func.func @_concat_kernel(%arg0: i32, %arg1: memref<8x256xf32, #tpu.memory_space<vmem>>, %arg2: memref<8x256xf32, #tpu.memory_space<vmem>>, %arg3: memref<8x512xf32, #tpu.memory_space<vmem>>) attributes {dimension_semantics = [#tpu.dimension_semantics<parallel>], iteration_bounds = array<i64: 1>, scalar_prefetch = 0 : i64, scratch_operands = 0 : i64, tpu.core_type = #tpu.core_type<tc>, window_params = [{transform_indices = @transform_0, window_bounds = array<i64: 8, 256>}, {transform_indices = @transform_1, window_bounds = array<i64: 8, 256>}, {transform_indices = @transform_2, window_bounds = array<i64: 8, 512>}]} {
    %c0 = arith.constant 0 : index
    %c0_0 = arith.constant 0 : index
    %0 = vector.load %arg1[%c0, %c0_0] : memref<8x256xf32, #tpu.memory_space<vmem>>, vector<8x256xf32>
    %c0_1 = arith.constant 0 : index
    %c0_2 = arith.constant 0 : index
    %1 = vector.load %arg3[%c0_1, %c0_2] : memref<8x512xf32, #tpu.memory_space<vmem>>, vector<8x256xf32>
    tpu.vector_store %arg3[%c0_1, %c0_2], %0 {strides = array<i32>} : memref<8x512xf32, #tpu.memory_space<vmem>>, vector<8x256xf32>,
    %c0_3 = arith.constant 0 : index
    %c0_4 = arith.constant 0 : index
    %2 = vector.load %arg2[%c0_3, %c0_4] : memref<8x256xf32, #tpu.memory_space<vmem>>, vector<8x256xf32>
    %c0_5 = arith.constant 0 : index
    %c256 = arith.constant 256 : index
    %3 = vector.load %arg3[%c0_5, %c256] : memref<8x512xf32, #tpu.memory_space<vmem>>, vector<8x256xf32>
    tpu.vector_store %arg3[%c0_5, %c256], %2 {strides = array<i32>} : memref<8x512xf32, #tpu.memory_space<vmem>>, vector<8x256xf32>,
    return
  }
  func.func @transform_0(%arg0: i32) -> (i32, i32) {
    %c0_i32 = arith.constant 0 : i32
    %c0_i32_0 = arith.constant 0 : i32
    return %arg0, %c0_i32 : i32, i32
  }
  func.func @transform_1(%arg0: i32) -> (i32, i32) {
    %c0_i32 = arith.constant 0 : i32
    %c0_i32_0 = arith.constant 0 : i32
    return %arg0, %c0_i32 : i32, i32
  }
  func.func @transform_2(%arg0: i32) -> (i32, i32) {
    %c0_i32 = arith.constant 0 : i32
    %c0_i32_0 = arith.constant 0 : i32
    return %arg0, %c0_i32 : i32, i32
  }
}

</mosaic_0001>

<llo_original>
// kernel: tpu_custom_call.1
$region0: #{tpu_custom_call.1}
  #allocation0 [shape = 'u32[]', space=smem, size = 0x4, offset = 0x4, fixed_abs, tag = 'smem constant byte address 0x4 - core index']
  #allocation1 [shape = 'u32[72,128]{1,0:T(1,128)}', space=vmem, size = 0x9000, scoped, tag = 'internal scratch']
  %s0 = inlined_call_operand.hbm [shape: f32[8,256], index: 0, kind: input, shape index: {}]
  %s1 = inlined_call_operand.hbm [shape: f32[8,256], index: 1, kind: input, shape index: {}]
  %s2 = inlined_call_operand.hbm [shape: f32[8,512], index: 2, kind: output, shape index: {}]
  %s3 = sld [smem:[#allocation0]]
  $region26: #{tpu_custom_call.1} parent=0
    _
  %s5 = ssub.s32 1, %s3
  %s6 = scalar_select 0, %s5, %s3
  $region1: #{tpu_custom_call.1} parent=0
    #allocation2 [shape = 'u8[8192]{0}', space=vmem, size = 0x2000, scoped, tag = 'input window, operand 0, single buffered']
    #allocation3 [shape = 's32[1]{0}', space=sflag, size = 0x4, scoped, tag = 'scoped memory for tpu_custom_call.1']
    #allocation4 [shape = 's32[1]{0}', space=sflag, size = 0x4, scoped, tag = 'scoped memory for tpu_custom_call.1']
    #allocation5 [shape = 'u8[8192]{0}', space=vmem, size = 0x2000, scoped, tag = 'input window, operand 1, single buffered']
    #allocation6 [shape = 's32[1]{0}', space=sflag, size = 0x4, scoped, tag = 'scoped memory for tpu_custom_call.1']
    #allocation7 [shape = 'u8[16384]{0}', space=vmem, size = 0x4000, scoped, tag = 'output window, operand 0, single buffered']
    %7 = vsyncpa [#allocation3], 0
    %8 = vsyncpa [#allocation6], 0
    %9 = vsyncpa [#allocation4], 0
    // Predicated region
    $region2: #{tpu_custom_call.1} parent=1 // pred_check
      _
    $region3: #{tpu_custom_call.1} parent=1 // pred_check_branch
      %11 = sbr.rel (0) target = $region5
    $region4: #{tpu_custom_call.1} parent=1 // pred_region
      %13 = vsyncadd [#allocation3], 0
      %s15 = sshll.u32 %s0, 4
      %s16 = int_to_ptr.hbm [resolvable:$true] %s15
      %s17 = sshll.u32 [#allocation2], 4
      %s18 = int_to_ptr.vmem [resolvable:$true] %s17
      %20 = dma.hbm_to_vmem [thread:$0]  %s16, 256, %s18, [#allocation3]
    $region5: #{tpu_custom_call.1} parent=1 // pred_fallthru
      _
    // Predicated region
    $region6: #{tpu_custom_call.1} parent=1 // pred_check
      _
    $region7: #{tpu_custom_call.1} parent=1 // pred_check_branch
      %22 = sbr.rel (0) target = $region9
    $region8: #{tpu_custom_call.1} parent=1 // pred_region
      %24 = vsyncadd [#allocation6], 0
      %s26 = sshll.u32 %s1, 4
      %s27 = int_to_ptr.hbm [resolvable:$true] %s26
      %s28 = sshll.u32 [#allocation5], 4
      %s29 = int_to_ptr.vmem [resolvable:$true] %s28
      %31 = dma.hbm_to_vmem [thread:$0]  %s27, 256, %s29, [#allocation6]
    $region9: #{tpu_custom_call.1} parent=1 // pred_fallthru
      _
    // Predicated region
    $region10: #{tpu_custom_call.1} parent=1 // pred_check
      _
    $region11: #{tpu_custom_call.1} parent=1 // pred_check_branch
      %33 = sbr.rel (0) target = $region13
    $region12: #{tpu_custom_call.1} parent=1 // pred_region
      %35 = dma.done [#allocation3], 256
    $region13: #{tpu_custom_call.1} parent=1 // pred_fallthru
      _
    // Predicated region
    $region14: #{tpu_custom_call.1} parent=1 // pred_check
      _
    $region15: #{tpu_custom_call.1} parent=1 // pred_check_branch
      %37 = sbr.rel (0) target = $region17
    $region16: #{tpu_custom_call.1} parent=1 // pred_region
      %39 = dma.done [#allocation6], 256
    $region17: #{tpu_custom_call.1} parent=1 // pred_fallthru
      _
    %v40 = vld [vmem:[#allocation2] sm:$0xff]
    %v41 = vld [vmem:[#allocation2 + $0x8] sm:$0xff]
    %42 = vst [vmem:[#allocation7] sm:$0xff] %v40
    %43 = vst [vmem:[#allocation7 + $0x8] sm:$0xff] %v41
    %v44 = vld [vmem:[#allocation5] sm:$0xff]
    %v45 = vld [vmem:[#allocation5 + $0x8] sm:$0xff]
    %46 = vst [vmem:[#allocation7 + $0x10] sm:$0xff] %v44
    %47 = vst [vmem:[#allocation7 + $0x18] sm:$0xff] %v45
    // Predicated region
    $region18: #{tpu_custom_call.1} parent=1 // pred_check
      _
    $region19: #{tpu_custom_call.1} parent=1 // pred_check_branch
      %49 = sbr.rel (0) target = $region21
    $region20: #{tpu_custom_call.1} parent=1 // pred_region
      %51 = vsyncadd [#allocation4], 0
      %s53 = sshll.u32 [#allocation7], 4
      %s54 = int_to_ptr.vmem [resolvable:$true] %s53
      %s55 = sshll.u32 %s2, 4
      %s56 = int_to_ptr.hbm [resolvable:$true] %s55
      %58 = dma.vmem_to_hbm [thread:$0]  %s54, 512, %s56, [#allocation4]
    $region21: #{tpu_custom_call.1} parent=1 // pred_fallthru
      _
    // Predicated region
    $region22: #{tpu_custom_call.1} parent=1 // pred_check
      _
    $region23: #{tpu_custom_call.1} parent=1 // pred_check_branch
      %60 = sbr.rel (0) target = $region25
    $region24: #{tpu_custom_call.1} parent=1 // pred_region
      %62 = dma.done [#allocation4], 512
    $region25: #{tpu_custom_call.1} parent=1 // pred_fallthru
      _
    %63 = vsyncpa [#allocation3], 1
    %64 = vsyncpa [#allocation6], 1
    %65 = vsyncpa [#allocation4], 1

</llo_original>
